<compile_context>
chip_gen: v5e
topology: v5e:2x2
jax: 0.10.0
libtpu: 0.0.40
codegen_flags: <defaults>
</compile_context>

<pallas_src>
import functools
import math

import jax
import jax.numpy as jnp
from jax import lax
from jax.experimental import pallas as pl
from jax.experimental.pallas import tpu as pltpu


# ---------------------------------------------------------------------------
# Kernels
# ---------------------------------------------------------------------------

def _log_softmax_kernel(x_ref, o_ref):
    """Numerically-stable log-softmax along the last (lane) axis.

    Whole rows are resident in VMEM; reductions in f32; result cast back to
    the output dtype.
    """
    x = x_ref[...].astype(jnp.float32)
    m = jnp.max(x, axis=-1, keepdims=True)
    shifted = x - m
    lse = jnp.log(jnp.sum(jnp.exp(shifted), axis=-1, keepdims=True))
    o_ref[...] = (shifted - lse).astype(o_ref.dtype)


def _lse_stats_kernel(x_ref, lse_ref, m_sc, l_sc, *, d_total, d_tile):
    """Pass 1 of the lane-tiled (huge last dim) path: online max / sum-exp.

    Grid = (row_tiles, d_tiles); d axis is "arbitrary" (reduction). The lse
    output block index is constant along d, so it stays resident and is only
    written back once per row tile.
    """
    k = pl.program_id(1)

    @pl.when(k == 0)
    def _():
        m_sc[...] = jnp.full_like(m_sc, -jnp.inf)
        l_sc[...] = jnp.zeros_like(l_sc)

    x = x_ref[...].astype(jnp.float32)
    # Mask lanes past the true last-dim extent (ragged final d tile) so they
    # don't contaminate the reduction.
    col = k * d_tile + lax.broadcasted_iota(jnp.int32, x.shape, 1)
    x = jnp.where(col < d_total, x, -jnp.inf)

    m_new = jnp.maximum(m_sc[...], jnp.max(x, axis=-1, keepdims=True))
    alpha = jnp.exp(m_sc[...] - m_new)
    l_sc[...] = alpha * l_sc[...] + jnp.sum(
        jnp.exp(x - m_new), axis=-1, keepdims=True)
    m_sc[...] = m_new

    @pl.when(k == pl.num_programs(1) - 1)
    def _():
        lse_ref[...] = m_sc[...] + jnp.log(l_sc[...])


def _normalize_kernel(x_ref, lse_ref, o_ref):
    """Pass 2 of the lane-tiled path: out = x - lse (lse already includes max)."""
    o_ref[...] = (x_ref[...].astype(jnp.float32) - lse_ref[...]).astype(o_ref.dtype)


# ---------------------------------------------------------------------------
# Generation-aware VMEM budgets & tile selection
# ---------------------------------------------------------------------------

@functools.lru_cache(maxsize=None)
def _vmem_capacity_bytes():
    try:
        return int(pltpu.get_tpu_info().vmem_capacity_bytes)
    except Exception:
        return 64 * 1024 * 1024  # conservative fallback: v7x per-core VMEM


def _vmem_work_budget():
    # Total live VMEM we allow the pipeline to use (blocks + f32 temps).
    return _vmem_capacity_bytes() // 2          # 64 MiB on v5e/v6e, 32 MiB on v7x


def _vmem_limit_bytes():
    # Scoped VMEM limit handed to Mosaic; leave headroom for compiler scratch.
    return (_vmem_capacity_bytes() * 3) // 4     # 96 MiB on v5e/v6e, 48 MiB on v7x


# Mild lower bound on grid steps (when the input is big enough) so the DMA
# pipeline has blocks to overlap and v7x megacore gets >=2 blocks per core.
_MIN_GRID_STEPS = 4


def _round_up(x, m):
    return ((x + m - 1) // m) * m


def _sublane_pack(dtype):
    """Native sublane packing: 8 for 4-byte, 16 for 2-byte, 32 for 1-byte dtypes."""
    return max(8, 32 // jnp.dtype(dtype).itemsize)


def _choose_row_tile(rows, d, itemsize, pack, budget):
    """Largest pack-aligned row tile whose live VMEM fits the budget.

    Live bytes per row ~= double-buffered input block + double-buffered output
    block + ~2 f32 intermediates (the in-kernel upcast), i.e. d*(4*itemsize+8).
    Returns None if even `pack` rows don't fit -> caller uses streamed path.
    """
    bytes_per_row = max(1, d * (4 * itemsize + 8))
    max_rows = (budget // bytes_per_row) // pack * pack
    if max_rows < pack:
        return None
    rows_for_steps = _round_up(max(1, -(-rows // _MIN_GRID_STEPS)), pack)
    row_tile = min(max_rows, max(pack, rows_for_steps))
    return min(row_tile, _round_up(rows, pack))


def _choose_streamed_tiles(rows, d, itemsize, pack, budget):
    """Tiles for the lane-tiled path (only used when whole rows don't fit)."""
    del rows
    row_tile = pack
    bytes_per_elem = 4 * itemsize + 8   # dbl-buffered in/out blocks + f32 temps
    d_tile = (budget // (row_tile * bytes_per_elem)) // 128 * 128
    d_tile = max(128, min(d_tile, _round_up(d, 128)))
    return row_tile, d_tile


# ---------------------------------------------------------------------------
# pallas_call wrappers
# ---------------------------------------------------------------------------

@functools.partial(jax.jit, static_argnames=("row_tile", "vmem_limit"))
def _log_softmax_rows(x2d, *, row_tile, vmem_limit):
    rows, d = x2d.shape
    itemsize = jnp.dtype(x2d.dtype).itemsize
    return pl.pallas_call(
        _log_softmax_kernel,
        out_shape=jax.ShapeDtypeStruct((rows, d), x2d.dtype),
        grid=(pl.cdiv(rows, row_tile),),
        in_specs=[pl.BlockSpec((row_tile, d), lambda i: (i, 0))],
        out_specs=pl.BlockSpec((row_tile, d), lambda i: (i, 0)),
        compiler_params=pltpu.CompilerParams(
            dimension_semantics=("parallel",),
            vmem_limit_bytes=vmem_limit,
        ),
        cost_estimate=pl.CostEstimate(
            flops=5 * rows * d,
            transcendentals=rows * d,
            bytes_accessed=2 * rows * d * itemsize,
        ),
    )(x2d)


@functools.partial(jax.jit, static_argnames=("row_tile", "d_tile", "vmem_limit"))
def _log_softmax_streamed(x2d, *, row_tile, d_tile, vmem_limit):
    rows, d = x2d.shape
    itemsize = jnp.dtype(x2d.dtype).itemsize
    row_steps = pl.cdiv(rows, row_tile)
    d_steps = pl.cdiv(d, d_tile)

    # Pass 1: per-row logsumexp (online over lane tiles).
    lse = pl.pallas_call(
        functools.partial(_lse_stats_kernel, d_total=d, d_tile=d_tile),
        out_shape=jax.ShapeDtypeStruct((rows, 1), jnp.float32),
        grid=(row_steps, d_steps),
        in_specs=[pl.BlockSpec((row_tile, d_tile), lambda i, k: (i, k))],
        out_specs=pl.BlockSpec((row_tile, 1), lambda i, k: (i, 0)),
        scratch_shapes=[pltpu.VMEM((row_tile, 1), jnp.float32),
                        pltpu.VMEM((row_tile, 1), jnp.float32)],
        compiler_params=pltpu.CompilerParams(
            dimension_semantics=("parallel", "arbitrary"),
            vmem_limit_bytes=vmem_limit,
        ),
        cost_estimate=pl.CostEstimate(
            flops=4 * rows * d,
            transcendentals=rows * d,
            bytes_accessed=rows * d * itemsize + rows * 4,
        ),
    )(x2d)

    # Pass 2: normalize.  TODO(synk): if small tiles ever expose DMA latency on
    # v7x here, sweep pipeline_mode=pl.Buffered(3) on the x input spec.
    out = pl.pallas_call(
        _normalize_kernel,
        out_shape=jax.ShapeDtypeStruct((rows, d), x2d.dtype),
        grid=(row_steps, d_steps),
        in_specs=[pl.BlockSpec((row_tile, d_tile), lambda i, k: (i, k)),
                  pl.BlockSpec((row_tile, 1), lambda i, k: (i, 0))],
        out_specs=pl.BlockSpec((row_tile, d_tile), lambda i, k: (i, k)),
        compiler_params=pltpu.CompilerParams(
            dimension_semantics=("parallel", "parallel"),
            vmem_limit_bytes=vmem_limit,
        ),
        cost_estimate=pl.CostEstimate(
            flops=rows * d,
            transcendentals=0,
            bytes_accessed=2 * rows * d * itemsize + rows * 4,
        ),
    )(x2d, lse)
    return out


# ---------------------------------------------------------------------------
# Public wrapper (forward pass of InferenceBatchSoftmax)
# ---------------------------------------------------------------------------

def inference_batch_softmax(x, training: bool = False):
    """training=True -> identity; training=False -> log_softmax over dim=-1."""
    if training:
        return x
    if x.size == 0:
        return x

    orig_shape = x.shape
    d = orig_shape[-1]
    rows = math.prod(orig_shape[:-1])  # == 1 for 1-D inputs
    x2d = x.reshape(rows, d)

    itemsize = jnp.dtype(x.dtype).itemsize
    pack = _sublane_pack(x.dtype)
    budget = _vmem_work_budget()
    vmem_limit = _vmem_limit_bytes()

    # TODO(synk): if d < 128 shapes show up in production, add the rows->lanes
    # re-layout (fold 128//d rows into the lane axis + segmented reductions) so
    # stores are unmasked lane-dense vst instead of vst.msk.
    row_tile = _choose_row_tile(rows, d, itemsize, pack, budget)
    if row_tile is not None:
        out2d = _log_softmax_rows(x2d, row_tile=row_tile, vmem_limit=vmem_limit)
    else:
        # Whole rows don't fit in VMEM (very large vocab): lane-tiled two-pass.
        r_tile, d_tile = _choose_streamed_tiles(rows, d, itemsize, pack, budget)
        out2d = _log_softmax_streamed(
            x2d, row_tile=r_tile, d_tile=d_tile, vmem_limit=vmem_limit)

    return out2d.reshape(orig_shape)


# ---------------------------------------------------------------------------
# Self-test
# ---------------------------------------------------------------------------

if __name__ == "__main__":
    key = jax.random.PRNGKey(0)

    # Small logits-like input: (batch=2, seq=8, hidden=32) -> rows = 16.
    x = jax.random.normal(key, (2, 8, 32), dtype=jnp.float32)
    out = jax.block_until_ready(inference_batch_softmax(x, training=False))
    ref = jax.nn.log_softmax(x, axis=-1)
    assert out.shape == x.shape and out.dtype == x.dtype
    assert jnp.max(jnp.abs(out - ref)) < 1e-5

    # Ragged row count (rows = 15, not a multiple of the row tile) exercises
    # the no-pad cdiv grid with a clipped final block.
    x_rag = jax.random.normal(jax.random.PRNGKey(1), (3, 5, 32), dtype=jnp.float32)
    out_rag = jax.block_until_ready(inference_batch_softmax(x_rag, training=False))
    ref_rag = jax.nn.log_softmax(x_rag, axis=-1)
    assert out_rag.shape == x_rag.shape
    assert jnp.max(jnp.abs(out_rag - ref_rag)) < 1e-5

    # bf16 input: output stays bf16 (reductions in f32 inside the kernel).
    x_bf = x.astype(jnp.bfloat16)
    out_bf = jax.block_until_ready(inference_batch_softmax(x_bf, training=False))
    ref_bf = jax.nn.log_softmax(x_bf.astype(jnp.float32), axis=-1)
    assert out_bf.dtype == jnp.bfloat16
    assert jnp.max(jnp.abs(out_bf.astype(jnp.float32) - ref_bf)) < 5e-2

    # Force the lane-tiled streamed path (small shapes, tiles forced by hand)
    # to verify the two-pass online log-softmax, including ragged row and d
    # tiles (13 rows, d = 320 = 2*128 + 64).
    x_s = jax.random.normal(jax.random.PRNGKey(2), (13, 320), dtype=jnp.float32)
    out_s = jax.block_until_ready(
        _log_softmax_streamed(x_s, row_tile=8, d_tile=128,
                              vmem_limit=_vmem_limit_bytes()))
    ref_s = jax.nn.log_softmax(x_s, axis=-1)
    assert jnp.max(jnp.abs(out_s - ref_s)) < 1e-5

    # Training-mode forward is identity.
    out_train = inference_batch_softmax(x, training=True)
    assert jnp.array_equal(out_train, x)

    print("KERNEL_OK")
</pallas_src>

<mosaic_0001>
module attributes {stable_mosaic.version = 11 : i64} {
  func.func @_log_softmax_kernel(%arg0: i32, %arg1: memref<8x32xf32, #tpu.memory_space<vmem>>, %arg2: memref<8x32xf32, #tpu.memory_space<vmem>>) attributes {dimension_semantics = [#tpu.dimension_semantics<parallel>], iteration_bounds = array<i64: 2>, scalar_prefetch = 0 : i64, scratch_operands = 0 : i64, tpu.core_type = #tpu.core_type<tc>, window_params = [{transform_indices = @transform_0, window_bounds = array<i64: 8, 32>}, {transform_indices = @transform_1, window_bounds = array<i64: 8, 32>}]} {
    %c0 = arith.constant 0 : index
    %c0_0 = arith.constant 0 : index
    %0 = vector.load %arg1[%c0, %c0_0] : memref<8x32xf32, #tpu.memory_space<vmem>>, vector<8x32xf32>
    %cst = arith.constant dense<0xFF800000> : vector<8xf32>
    %1 = vector.multi_reduction <maximumf>, %0, %cst [1] : vector<8x32xf32> to vector<8xf32>
    %2 = vector.shape_cast %1 : vector<8xf32> to vector<8x1xf32>
    %3 = vector.broadcast %2 : vector<8x1xf32> to vector<8x32xf32>
    %4 = arith.subf %0, %3 : vector<8x32xf32>
    %5 = math.exp %4 : vector<8x32xf32>
    %cst_1 = arith.constant dense<0.000000e+00> : vector<8xf32>
    %6 = vector.multi_reduction <add>, %5, %cst_1 [1] : vector<8x32xf32> to vector<8xf32>
    %7 = vector.shape_cast %6 : vector<8xf32> to vector<8x1xf32>
    %8 = math.log %7 : vector<8x1xf32>
    %9 = vector.broadcast %8 : vector<8x1xf32> to vector<8x32xf32>
    %10 = arith.subf %4, %9 : vector<8x32xf32>
    %c0_2 = arith.constant 0 : index
    %c0_3 = arith.constant 0 : index
    %11 = vector.load %arg2[%c0_2, %c0_3] : memref<8x32xf32, #tpu.memory_space<vmem>>, vector<8x32xf32>
    tpu.vector_store %arg2[%c0_2, %c0_3], %10 {strides = array<i32>} : memref<8x32xf32, #tpu.memory_space<vmem>>, vector<8x32xf32>,
    return
  }
  func.func @transform_0(%arg0: i32) -> (i32, i32) {
    %c0_i32 = arith.constant 0 : i32
    %c0_i32_0 = arith.constant 0 : i32
    return %arg0, %c0_i32 : i32, i32
  }
  func.func @transform_1(%arg0: i32) -> (i32, i32) {
    %c0_i32 = arith.constant 0 : i32
    %c0_i32_0 = arith.constant 0 : i32
    return %arg0, %c0_i32 : i32, i32
  }
}

</mosaic_0001>

<llo_original>
// kernel: _log_softmax_rows.1
$region0: #{_log_softmax_rows.1}
  #allocation0 [shape = 'u32[]', space=smem, size = 0x4, offset = 0x4, fixed_abs, tag = 'smem constant byte address 0x4 - core index']
  #allocation1 [shape = 'u32[72,128]{1,0:T(1,128)}', space=vmem, size = 0x9000, scoped, tag = 'internal scratch']
  %s0 = inlined_call_operand.hbm [shape: f32[16,32], index: 0, kind: input, shape index: {}]
  %s1 = inlined_call_operand.hbm [shape: f32[16,32], index: 1, kind: output, shape index: {}]
  %s2 = sld [smem:[#allocation0]]
  $region41: #{_log_softmax_rows.1} parent=0
    _
  %s4 = ssub.s32 1, %s2
  %s5 = scalar_select 0, %s4, %s2
  $region1: #{_log_softmax_rows.1} parent=0
    #allocation2 [shape = 'u8[8192]{0}', space=vmem, size = 0x2000, scoped, tag = 'input window, operand 0']
    #allocation3 [shape = 's32[2]{0}', space=sflag, size = 0x8, scoped, tag = 'scoped memory for _log_softmax_rows.1']
    #allocation4 [shape = 's32[2]{0}', space=sflag, size = 0x8, scoped, tag = 'scoped memory for _log_softmax_rows.1']
    #allocation5 [shape = 'u8[8192]{0}', space=vmem, size = 0x2000, scoped, tag = 'output window, operand 0']
    %6 = vsyncpa [#allocation3], 0
    %s7 = scalar_lea.sflag [#allocation3], 1
    %8 = vsyncpa %s7, 0
    %9 = vsyncpa [#allocation4], 0
    %s10 = scalar_lea.sflag [#allocation4], 1
    %11 = vsyncpa %s10, 0
    loop: start=0, step=1, limit=4
    $region2: #{_log_softmax_rows.1} parent=1 // loop_pre_header
      _
    $region3: #{_log_softmax_rows.1} parent=1 // loop_header
      %s13 = sphi 0, %s17
      %p14 = scmp.ge.s32.totalorder %s13, 4
      %s23 = sphi 0, %s25
      %s26 = sphi 0, %s23
      %s27 = sphi 0, %s26
      %s43 = sphi 0, %s27
      %s49 = sphi 0, %s51
      %s52 = sphi 0, %s49
      %s53 = sphi 0, %s52
      %s69 = sphi 0, %s53
    $region4: #{_log_softmax_rows.1} parent=1 // loop_header_branch
      %16 = sbr.rel (%p14) target = $region8
    $region5: #{_log_softmax_rows.1} parent=1 // loop_body
      %s18 = ssub.s32 %s13, 1
      %s19 = ssub.s32 %s13, 2
      %s20 = sadd.s32 %s13, 1
      %s21 = ssub.s32 %s13, %s20
      %p22 = scmp.eq.s32.totalorder %s21, 0
      %s24 = sadd.s32 %s23, 1
      %s25 = scalar_select %p22, %s23, %s24
      %p28 = pneg %p22
      %p29 = scmp.eq.s32.totalorder %s13, 1
      %p30 = por %p28, %p29
      %p31 = scmp.ne.s32.totalorder %s23, %s26
      %p32 = scmp.eq.s32.totalorder %s13, 0
      %p33 = por %p31, %p32
      %p34 = scmp.ne.s32.totalorder %s23, %s26
      %p35 = scmp.eq.s32.totalorder %s18, 1
      %p36 = por %p34, %p35
      %p37 = scmp.ne.s32.totalorder %s26, %s27
      %p38 = scmp.eq.s32.totalorder %s18, 0
      %p39 = por %p37, %p38
      %p40 = scmp.ne.s32.totalorder %s26, %s27
      %p41 = scmp.eq.s32.totalorder %s19, 1
      %p42 = por %p40, %p41
      %p44 = scmp.ne.s32.totalorder %s27, %s43
      %p45 = scmp.eq.s32.totalorder %s19, 0
      %p46 = por %p44, %p45
      %s47 = ssub.s32 %s13, %s20
      %p48 = scmp.eq.s32.totalorder %s47, 0
      %s50 = sadd.s32 %s49, 1
      %s51 = scalar_select %p48, %s49, %s50
      %p54 = pneg %p48
      %p55 = scmp.eq.s32.totalorder %s13, 1
      %p56 = por %p54, %p55
      %p57 = scmp.ne.s32.totalorder %s49, %s52
      %p58 = scmp.eq.s32.totalorder %s13, 0
      %p59 = por %p57, %p58
      %p60 = scmp.ne.s32.totalorder %s49, %s52
      %p61 = scmp.eq.s32.totalorder %s18, 1
      %p62 = por %p60, %p61
      %p63 = scmp.ne.s32.totalorder %s52, %s53
      %p64 = scmp.eq.s32.totalorder %s18, 0
      %p65 = por %p63, %p64
      %p66 = scmp.ne.s32.totalorder %s52, %s53
      %p67 = scmp.eq.s32.totalorder %s19, 1
      %p68 = por %p66, %p67
      %p70 = scmp.ne.s32.totalorder %s53, %s69
      %p71 = scmp.eq.s32.totalorder %s19, 0
      %p72 = por %p70, %p71
      %p73 = scmp.le.s32.totalorder 1, %s13
      %p74 = scmp.lt.s32.totalorder %s13, 3
      %p75 = pnand %p73, %p74
      %p76 = pneg %p75
      // Predicated region
      $region9: #{_log_softmax_rows.1} parent=5 // pred_check
        _
      $region10: #{_log_softmax_rows.1} parent=5 // pred_check_branch
        %78 = sbr.rel (%p75) target = $region12
      $region11: #{_log_softmax_rows.1} parent=5 // pred_region
        %s79 = ssub.s32 %s13, 1
      $region12: #{_log_softmax_rows.1} parent=5 // pred_fallthru
        _
      %p80 = scmp.lt.s32.totalorder %s13, 2
      // Predicated region
      $region13: #{_log_softmax_rows.1} parent=5 // pred_check
        %p81 = pneg %p80
      $region14: #{_log_softmax_rows.1} parent=5 // pred_check_branch
        %83 = sbr.rel (%p81) target = $region16
      $region15: #{_log_softmax_rows.1} parent=5 // pred_region
        // Predicated region
        $region17: #{_log_softmax_rows.1} parent=15 // pred_check
          %p84 = pneg %p33
        $region18: #{_log_softmax_rows.1} parent=15 // pred_check_branch
          %86 = sbr.rel (%p84) target = $region20
        $region19: #{_log_softmax_rows.1} parent=15 // pred_region
          %s87 = sand.u32 %s23, 1
          %s88 = scalar_lea.sflag [#allocation3], %s87
          %s89 = sand.u32 %s23, 1
          %s90 = smul.addr %s89, 8
          %s91 = scalar_lea.vmem [#allocation2], %s90
          %93 = vsyncadd %s88, 0
          %s94 = smul.addr %s13, 8
          %s95 = scalar_lea.hbm %s0, %s94
          %s97 = sshll.u32 %s95, 4
          %s98 = int_to_ptr.hbm [resolvable:$true] %s97
          %s99 = sshll.u32 %s91, 4
          %s100 = int_to_ptr.vmem [resolvable:$true] %s99
          %102 = dma.hbm_to_vmem [thread:$0]  %s98, 128, %s100, %s88
        $region20: #{_log_softmax_rows.1} parent=15 // pred_fallthru
          _
      $region16: #{_log_softmax_rows.1} parent=5 // pred_fallthru
        _
      %p103 = scmp.le.s32.totalorder 1, %s13
      %p104 = scmp.lt.s32.totalorder %s13, 3
      %p105 = pnand %p103, %p104
      %p106 = pneg %p105
      // Predicated region
      $region21: #{_log_softmax_rows.1} parent=5 // pred_check
        _
      $region22: #{_log_softmax_rows.1} parent=5 // pred_check_branch
        %108 = sbr.rel (%p105) target = $region24
      $region23: #{_log_softmax_rows.1} parent=5 // pred_region
        %s109 = ssub.s32 %s13, 1
        %s110 = sand.u32 %s26, 1
        %s111 = scalar_lea.sflag [#allocation3], %s110
        %s112 = sand.u32 %s26, 1
        %s113 = smul.addr %s112, 8
        %s114 = scalar_lea.vmem [#allocation2], %s113
        // Predicated region
        $region25: #{_log_softmax_rows.1} parent=23 // pred_check
          %p115 = pneg %p39
        $region26: #{_log_softmax_rows.1} parent=23 // pred_check_branch
          %117 = sbr.rel (%p115) target = $region28
        $region27: #{_log_softmax_rows.1} parent=23 // pred_region
          %119 = dma.done %s111, 128
        $region28: #{_log_softmax_rows.1} parent=23 // pred_fallthru
          _
        %s120 = sand.u32 %s26, 1
        %s121 = scalar_lea.sflag [#allocation3], %s120
        %s122 = sand.u32 %s26, 1
        %s123 = smul.addr %s122, 8
        %s124 = scalar_lea.vmem [#allocation2], %s123
        %p125 = pneg %p39
        %p126 = pneg %p36
        %p127 = pneg %p65
        %p128 = pneg %p62
        %s129 = sand.u32 %s52, 1
        %s130 = scalar_lea.sflag [#allocation4], %s129
        %s131 = sand.u32 %s52, 1
        %s132 = smul.addr %s131, 8
        %s133 = scalar_lea.vmem [#allocation5], %s132
        %v134 = vld [vmem:[%s114] sm:$0xff]
        %vm135 = vcmask 261120
        %v136 = vsel %vm135, %v134, -inf
        %137 = vmax.xlane.f32.xlu0 %v136
        %v138 = vpop.xlane.xlu0 %137
        %v139 = vsub.f32 %v134, %v138
        %v140 = vmul.f32 %v139, 1.442695
        %v141 = vpow.pop %v140
        %v142 = vsel %vm135, %v141, 0.0
        %143 = vadd.xlane.f32.xlu0 %v142
        %v144 = vpop.xlane.xlu0 %143
        %v145 = vlog2.pop %v144
        %v146 = vmul.f32 %v145, 0.6931472
        %v147 = vsub.f32 %v139, %v146
        %148 = vst.msk [vmem:[%s133] sm:$0xff] %vm135, %v147
        %s149 = sand.u32 %s52, 1
        %s150 = scalar_lea.sflag [#allocation4], %s149
        %s151 = sand.u32 %s52, 1
        %s152 = smul.addr %s151, 8
        %s153 = scalar_lea.vmem [#allocation5], %s152
        // Predicated region
        $region29: #{_log_softmax_rows.1} parent=23 // pred_check
          %p154 = pneg %p62
        $region30: #{_log_softmax_rows.1} parent=23 // pred_check_branch
          %156 = sbr.rel (%p154) target = $region32
        $region31: #{_log_softmax_rows.1} parent=23 // pred_region
          %158 = vsyncadd %s150, 0
          %s159 = smul.addr %s18, 8
          %s160 = scalar_lea.hbm %s1, %s159
          %s162 = sshll.u32 %s153, 4
          %s163 = int_to_ptr.vmem [resolvable:$true] %s162
          %s164 = sshll.u32 %s160, 4
          %s165 = int_to_ptr.hbm [resolvable:$true] %s164
          %167 = dma.vmem_to_hbm [thread:$0]  %s163, 128, %s165, %s150
        $region32: #{_log_softmax_rows.1} parent=23 // pred_fallthru
          _
      $region24: #{_log_softmax_rows.1} parent=5 // pred_fallthru
        _
      %p168 = scmp.le.s32.totalorder 2, %s13
      // Predicated region
      $region33: #{_log_softmax_rows.1} parent=5 // pred_check
        %p169 = pneg %p168
      $region34: #{_log_softmax_rows.1} parent=5 // pred_check_branch
        %171 = sbr.rel (%p169) target = $region36
      $region35: #{_log_softmax_rows.1} parent=5 // pred_region
        %s172 = ssub.s32 %s13, 2
        // Predicated region
        $region37: #{_log_softmax_rows.1} parent=35 // pred_check
          %p173 = pneg %p68
        $region38: #{_log_softmax_rows.1} parent=35 // pred_check_branch
          %175 = sbr.rel (%p173) target = $region40
        $region39: #{_log_softmax_rows.1} parent=35 // pred_region
          %s176 = sand.u32 %s53, 1
          %s177 = scalar_lea.sflag [#allocation4], %s176
          %s178 = sand.u32 %s53, 1
          %s179 = smul.addr %s178, 8
          %s180 = scalar_lea.vmem [#allocation5], %s179
          %182 = dma.done %s177, 128
        $region40: #{_log_softmax_rows.1} parent=35 // pred_fallthru
          _
      $region36: #{_log_softmax_rows.1} parent=5 // pred_fallthru
        _
    $region6: #{_log_softmax_rows.1} parent=1 // loop_footer
      %s17 = sadd.s32 1, %s13
    $region7: #{_log_softmax_rows.1} parent=1 // loop_footer_branch
      %12 = sbr.rel target = $region3
    $region8: #{_log_softmax_rows.1} parent=1 // loop_exit
      _
    %183 = vsyncpa [#allocation3], 1
    %s184 = scalar_lea.sflag [#allocation3], 1
    %185 = vsyncpa %s184, 1
    %186 = vsyncpa [#allocation4], 1
    %s187 = scalar_lea.sflag [#allocation4], 1
    %188 = vsyncpa %s187, 1

</llo_original>
